<compile_context>
chip_gen: v5e
topology: v5e:2x2
jax: 0.10.0
libtpu: 0.0.40
codegen_flags: <defaults>
</compile_context>

<pallas_src>
import functools

import jax
import jax.numpy as jnp
import numpy as np
from jax import lax
from jax.experimental import pallas as pl
from jax.experimental.pallas import tpu as pltpu

BN_EPS = 1e-5
NUM_STAT_SHARDS = 2          # leading "parallel" axis of pass 1 (v7x megacore); harmless on 1-TC chips


def _round_up(x, m):
    return (x + m - 1) // m * m


# -------- pass 1: z = xcol @ W, store z, accumulate per-channel sum / sum-of-squares --------
def _conv_stats_kernel(xcol_ref, w_ref, z_ref, sum_ref, sumsq_ref):
    @pl.when(pl.program_id(1) == 0)
    def _():
        sum_ref[...] = jnp.zeros_like(sum_ref)
        sumsq_ref[...] = jnp.zeros_like(sumsq_ref)

    # Conv as a single fused matmul (bf16 in, f32 accumulate on the MXU).
    z = jnp.dot(xcol_ref[...], w_ref[...], preferred_element_type=jnp.float32)
    z_ref[...] = z.astype(z_ref.dtype)

    # Batch statistics.  Zero-padded xcol rows produce exact zeros, so no masking is needed.
    # Accumulate into sublane row 0 of this shard's (8, C) block; rows 1..7 stay zero and the
    # wrapper sums all rows across shards.
    sum_ref[0:1, :] += jnp.sum(z, axis=0, keepdims=True)
    sumsq_ref[0:1, :] += jnp.sum(z * z, axis=0, keepdims=True)


# -------- pass 2: y = z*scale + shift ; out = y_value * sigmoid(y_gate)  (no matmul) --------
def _norm_glu_kernel(z_ref, scale_ref, shift_ref, out_ref, *, half):
    y = z_ref[...].astype(jnp.float32) * scale_ref[...] + shift_ref[...]
    out_ref[...] = (y[:, :half] * jax.nn.sigmoid(y[:, half:])).astype(out_ref.dtype)


def gated_conv_bn1d(x_ncl, weight, bias, bn_gamma, bn_beta, *,
                    stride=1, padding=0, dilation=1, row_tile=None,
                    compute_dtype=jnp.bfloat16, z_dtype=jnp.float32,
                    out_dtype=jnp.float32):
    """x_ncl: (N, C_in, L); weight: (2*C_out, C_in, K); bias/gamma/beta: (2*C_out,).

    Note: under train-mode BatchNorm (batch statistics) the conv bias shifts z and its batch
    mean equally and therefore cancels exactly; `bias` is accepted for interface parity only.
    """
    _ = bias
    N, C_in, L = x_ncl.shape
    two_cout, _, K = weight.shape
    C_out = two_cout // 2
    L_out = (L + 2 * padding - dilation * (K - 1) - 1) // stride + 1
    R = N * L_out
    KC = K * C_in

    # Each GLU half zero-padded to a 128-multiple -> lane-dense matmul / splits / stores.
    C_half = _round_up(C_out, 128)
    C2p = 2 * C_half

    # ---- row-tile selection: explicit ~16 MiB VMEM budget for the double-buffered tiles ----
    x_item = np.dtype(compute_dtype).itemsize
    z_item = np.dtype(z_dtype).itemsize
    o_item = np.dtype(out_dtype).itemsize
    if row_tile is None:
        per_row = max(2 * KC * x_item + 2 * C2p * z_item,      # pass 1: xcol in + z out (x2 bufs)
                      2 * C2p * z_item + 2 * C_half * o_item)  # pass 2: z in + out (x2 bufs)
        row_tile = (16 << 20) // per_row
    row_tile = int(max(16, min(4096, (row_tile // 16) * 16)))  # multiple of 16 (bf16 sublanes)
    TR = min(row_tile, _round_up(R, 16))
    R_pad = _round_up(R, TR * NUM_STAT_SHARDS)                 # tiles split evenly across shards
    n_tiles = R_pad // TR
    tiles_per_shard = n_tiles // NUM_STAT_SHARDS

    # ---- im2col glue (bf16 to halve prologue HBM traffic). See TODO(synk) above. ----
    x_nlc = jnp.transpose(x_ncl, (0, 2, 1)).astype(compute_dtype)
    x_pad = jnp.pad(x_nlc, ((0, 0), (padding, padding), (0, 0)))
    taps = []
    for k in range(K):
        start = k * dilation
        taps.append(lax.slice(x_pad, (0, start, 0),
                              (N, start + (L_out - 1) * stride + 1, C_in),
                              (1, stride, 1)))                 # (N, L_out, C_in)
    xcol = jnp.concatenate(taps, axis=-1).reshape(R, KC)
    xcol = jnp.pad(xcol, ((0, R_pad - R), (0, 0)))

    # weight (2*C_out, C_in, K) -> (K*C_in, 2*C_out) with col = k*C_in + c, then place
    # [value half | gate half] at 128-aligned lane offsets.
    w_mat = jnp.transpose(weight, (2, 1, 0)).reshape(KC, 2 * C_out).astype(jnp.float32)
    w_full = jnp.zeros((KC, C2p), jnp.float32)
    w_full = w_full.at[:, :C_out].set(w_mat[:, :C_out])
    w_full = w_full.at[:, C_half:C_half + C_out].set(w_mat[:, C_out:])
    w_full = w_full.astype(compute_dtype)

    def _place(v, fill=0.0):
        row = jnp.full((1, C2p), fill, jnp.float32)
        row = row.at[0, :C_out].set(v[:C_out])
        row = row.at[0, C_half:C_half + C_out].set(v[C_out:])
        return row

    g_p = _place(bn_gamma.astype(jnp.float32), fill=1.0)
    t_p = _place(bn_beta.astype(jnp.float32))

    xspec = pl.BlockSpec((TR, KC), lambda c, i: (c * tiles_per_shard + i, 0))     # streamed rows
    wspec = pl.BlockSpec((KC, C2p), lambda c, i: (0, 0))                          # resident weights
    zspec_out = pl.BlockSpec((TR, C2p), lambda c, i: (c * tiles_per_shard + i, 0))
    statspec = pl.BlockSpec((8, C2p), lambda c, i: (c, 0))                        # per-shard block

    flops_mm = 2 * R_pad * KC * C2p

    # ---- pass 1: conv matmul + z store + per-shard batch sum / sum-of-squares ----
    z_buf, stat_sum, stat_sq = pl.pallas_call(
        _conv_stats_kernel,
        out_shape=[jax.ShapeDtypeStruct((R_pad, C2p), z_dtype),
                   jax.ShapeDtypeStruct((NUM_STAT_SHARDS * 8, C2p), jnp.float32),
                   jax.ShapeDtypeStruct((NUM_STAT_SHARDS * 8, C2p), jnp.float32)],
        grid_spec=pltpu.PrefetchScalarGridSpec(
            num_scalar_prefetch=0,
            grid=(NUM_STAT_SHARDS, tiles_per_shard),
            in_specs=[xspec, wspec],
            out_specs=[zspec_out, statspec, statspec]),
        compiler_params=pltpu.CompilerParams(
            dimension_semantics=("parallel", "arbitrary"),   # stat shards parallel, row tiles reduce
            vmem_limit_bytes=32 << 20),
        cost_estimate=pl.CostEstimate(
            flops=flops_mm + 3 * R_pad * C2p,
            transcendentals=0,
            bytes_accessed=(R_pad * KC * x_item + KC * C2p * x_item
                            + R_pad * C2p * z_item + 2 * NUM_STAT_SHARDS * 8 * C2p * 4)),
    )(xcol, w_full)

    # ---- fold BN batch statistics into one affine (f32); conv bias cancels under batch BN ----
    z_sum = jnp.sum(stat_sum, axis=0, keepdims=True)        # combine shard partials (1, C2p)
    z_sq = jnp.sum(stat_sq, axis=0, keepdims=True)
    mean_z = z_sum / R                                       # divide by TRUE row count
    # NOTE: E[z^2]-E[z]^2 in f32 can lose precision when |mean| >> std; clamp keeps it >= 0.
    var = jnp.maximum(z_sq / R - mean_z * mean_z, 0.0)
    scale = g_p * lax.rsqrt(var + BN_EPS)
    shift = t_p - mean_z * scale

    cspec = pl.BlockSpec((1, C2p), lambda i: (0, 0))

    # ---- pass 2: elementwise BN affine + GLU, lane-dense (TR, C_half) stores ----
    out = pl.pallas_call(
        functools.partial(_norm_glu_kernel, half=C_half),
        out_shape=jax.ShapeDtypeStruct((R_pad, C_half), out_dtype),
        grid_spec=pltpu.PrefetchScalarGridSpec(
            num_scalar_prefetch=0, grid=(n_tiles,),
            in_specs=[pl.BlockSpec((TR, C2p), lambda i: (i, 0)), cspec, cspec],
            out_specs=pl.BlockSpec((TR, C_half), lambda i: (i, 0))),
        compiler_params=pltpu.CompilerParams(
            dimension_semantics=("parallel",),               # independent row tiles (megacore)
            vmem_limit_bytes=32 << 20),
        cost_estimate=pl.CostEstimate(
            flops=3 * R_pad * C2p,
            transcendentals=R_pad * C_half,
            bytes_accessed=(R_pad * C2p * z_item + R_pad * C_half * o_item + 2 * C2p * 4)),
    )(z_buf, scale, shift)

    # slice off row/lane padding; back to the PyTorch layout (N, C_out, L_out)
    out = out[:R, :C_out].reshape(N, L_out, C_out)
    return jnp.transpose(out, (0, 2, 1))


def _reference(x_ncl, weight, bias, bn_gamma, bn_beta,
               *, stride=1, padding=0, dilation=1):
    """Pure-JAX reference (conv via lax, BN batch stats, GLU)."""
    y = lax.conv_general_dilated(
        x_ncl.astype(jnp.float32), weight.astype(jnp.float32),
        window_strides=(stride,), padding=[(padding, padding)],
        rhs_dilation=(dilation,),
        dimension_numbers=("NCH", "OIH", "NCH"))
    y = y + bias[None, :, None]
    mean = jnp.mean(y, axis=(0, 2), keepdims=True)
    var = jnp.mean((y - mean) ** 2, axis=(0, 2), keepdims=True)
    y = (y - mean) * lax.rsqrt(var + BN_EPS)
    y = y * bn_gamma[None, :, None] + bn_beta[None, :, None]
    c = y.shape[1] // 2
    return y[:, :c] * jax.nn.sigmoid(y[:, c:])


if __name__ == "__main__":
    key = jax.random.PRNGKey(0)
    # Small analogs of net.encoder_conv1 (k=5,s=1,p=2) and encoder_conv2 (k=4,s=2,p=1).
    configs = [
        dict(N=4, C_in=20, L=16, C_out=16, K=5, stride=1, padding=2),   # 2 tiles per stat shard
        dict(N=2, C_in=24, L=20, C_out=16, K=4, stride=2, padding=1),   # exercises padded rows
    ]
    for cfg in configs:
        key, kx, kw, kb, kg, kt = jax.random.split(key, 6)
        N, C_in, L = cfg["N"], cfg["C_in"], cfg["L"]
        C_out, K = cfg["C_out"], cfg["K"]
        stride, padding = cfg["stride"], cfg["padding"]

        x = jax.random.normal(kx, (N, C_in, L), jnp.float32)
        fan_in = C_in * K
        bound = 1.0 / np.sqrt(fan_in)
        weight = jax.random.uniform(kw, (2 * C_out, C_in, K), jnp.float32, -bound, bound)
        bias = jax.random.uniform(kb, (2 * C_out,), jnp.float32, -bound, bound)
        bn_gamma = jax.random.uniform(kg, (2 * C_out,), jnp.float32, 0.8, 1.2)
        bn_beta = jax.random.uniform(kt, (2 * C_out,), jnp.float32, -0.2, 0.2)

        # Quantize conv operands to bf16-representable values for BOTH paths, so the f32
        # reference and the bf16-MXU / f32-accumulate kernel see identical inputs.
        xq = x.astype(jnp.bfloat16).astype(jnp.float32)
        wq = weight.astype(jnp.bfloat16).astype(jnp.float32)

        # row_tile=16 forces a multi-tile grid (and padded rows for the second config),
        # exercising cross-tile + cross-shard BN accumulation on these small shapes.
        out = gated_conv_bn1d(xq, wq, bias, bn_gamma, bn_beta,
                              stride=stride, padding=padding, row_tile=16)
        out = jax.block_until_ready(out)

        ref = _reference(xq, wq, bias, bn_gamma, bn_beta,
                         stride=stride, padding=padding)
        np.testing.assert_allclose(np.asarray(out), np.asarray(ref),
                                   rtol=2e-3, atol=2e-3)

        L_out = (L + 2 * padding - (K - 1) - 1) // stride + 1
        assert out.shape == (N, C_out, L_out)

    print("KERNEL_OK")
</pallas_src>

<mosaic_0001>
module attributes {stable_mosaic.version = 11 : i64} {
  func.func @_conv_stats_kernel(%arg0: i32, %arg1: i32, %arg2: memref<16x100xbf16, #tpu.memory_space<vmem>>, %arg3: memref<100x256xbf16, #tpu.memory_space<vmem>>, %arg4: memref<16x256xf32, #tpu.memory_space<vmem>>, %arg5: memref<8x256xf32, #tpu.memory_space<vmem>>, %arg6: memref<8x256xf32, #tpu.memory_space<vmem>>) attributes {dimension_semantics = [#tpu.dimension_semantics<parallel>, #tpu.dimension_semantics<arbitrary>], iteration_bounds = array<i64: 2, 2>, scalar_prefetch = 0 : i64, scratch_operands = 0 : i64, tpu.core_type = #tpu.core_type<tc>, window_params = [{transform_indices = @transform_0, window_bounds = array<i64: 16, 100>}, {pipeline_mode = #tpu.pipeline_mode<synchronous>, transform_indices = @transform_1, window_bounds = array<i64: 100, 256>}, {transform_indices = @transform_2, window_bounds = array<i64: 16, 256>}, {transform_indices = @transform_3, window_bounds = array<i64: 8, 256>}, {transform_indices = @transform_4, window_bounds = array<i64: 8, 256>}]} {
    %c0_i32 = arith.constant 0 : i32
    %0 = arith.cmpi eq, %arg1, %c0_i32 : i32
    %1 = arith.extui %0 : i1 to i32
    %c0_i32_0 = arith.constant 0 : i32
    %2 = arith.cmpi ne, %1, %c0_i32_0 : i32
    scf.if %2 {
      %cst_16 = arith.constant 0.000000e+00 : f32
      %18 = vector.broadcast %cst_16 : f32 to vector<8x256xf32>
      %c0_17 = arith.constant 0 : index
      %c0_18 = arith.constant 0 : index
      %19 = vector.load %arg5[%c0_17, %c0_18] : memref<8x256xf32, #tpu.memory_space<vmem>>, vector<8x256xf32>
      tpu.vector_store %arg5[%c0_17, %c0_18], %18 {strides = array<i32>} : memref<8x256xf32, #tpu.memory_space<vmem>>, vector<8x256xf32>,
      %cst_19 = arith.constant 0.000000e+00 : f32
      %20 = vector.broadcast %cst_19 : f32 to vector<8x256xf32>
      %c0_20 = arith.constant 0 : index
      %c0_21 = arith.constant 0 : index
      %21 = vector.load %arg6[%c0_20, %c0_21] : memref<8x256xf32, #tpu.memory_space<vmem>>, vector<8x256xf32>
      tpu.vector_store %arg6[%c0_20, %c0_21], %20 {strides = array<i32>} : memref<8x256xf32, #tpu.memory_space<vmem>>, vector<8x256xf32>,
    } else {
    }
    %c0 = arith.constant 0 : index
    %c0_1 = arith.constant 0 : index
    %3 = vector.load %arg2[%c0, %c0_1] : memref<16x100xbf16, #tpu.memory_space<vmem>>, vector<16x100xbf16>
    %c0_2 = arith.constant 0 : index
    %c0_3 = arith.constant 0 : index
    %4 = vector.load %arg3[%c0_2, %c0_3] : memref<100x256xbf16, #tpu.memory_space<vmem>>, vector<100x256xbf16>
    %cst = arith.constant dense<0.000000e+00> : vector<16x256xf32>
    %5 = tpu.matmul %3, %4, %cst {dimension_numbers = #tpu.dot_dimension_numbers<[1], [0], [0], [1], [0, 0, 1, 1], [], []>} : vector<16x100xbf16>, vector<100x256xbf16>, vector<16x256xf32> -> vector<16x256xf32>
    %c0_4 = arith.constant 0 : index
    %c0_5 = arith.constant 0 : index
    %6 = vector.load %arg4[%c0_4, %c0_5] : memref<16x256xf32, #tpu.memory_space<vmem>>, vector<16x256xf32>
    tpu.vector_store %arg4[%c0_4, %c0_5], %5 {strides = array<i32>} : memref<16x256xf32, #tpu.memory_space<vmem>>, vector<16x256xf32>,
    %c0_6 = arith.constant 0 : index
    %c0_7 = arith.constant 0 : index
    %7 = vector.load %arg5[%c0_6, %c0_7] : memref<8x256xf32, #tpu.memory_space<vmem>>, vector<1x256xf32>
    %cst_8 = arith.constant dense<0.000000e+00> : vector<256xf32>
    %8 = vector.multi_reduction <add>, %5, %cst_8 [0] : vector<16x256xf32> to vector<256xf32>
    %9 = vector.shape_cast %8 : vector<256xf32> to vector<1x256xf32>
    %10 = arith.addf %7, %9 : vector<1x256xf32>
    %c0_9 = arith.constant 0 : index
    %c0_10 = arith.constant 0 : index
    %11 = vector.load %arg5[%c0_9, %c0_10] : memref<8x256xf32, #tpu.memory_space<vmem>>, vector<1x256xf32>
    tpu.vector_store %arg5[%c0_9, %c0_10], %10 {strides = array<i32>} : memref<8x256xf32, #tpu.memory_space<vmem>>, vector<1x256xf32>,
    %c0_11 = arith.constant 0 : index
    %c0_12 = arith.constant 0 : index
    %12 = vector.load %arg6[%c0_11, %c0_12] : memref<8x256xf32, #tpu.memory_space<vmem>>, vector<1x256xf32>
    %13 = arith.mulf %5, %5 : vector<16x256xf32>
    %cst_13 = arith.constant dense<0.000000e+00> : vector<256xf32>
    %14 = vector.multi_reduction <add>, %13, %cst_13 [0] : vector<16x256xf32> to vector<256xf32>
    %15 = vector.shape_cast %14 : vector<256xf32> to vector<1x256xf32>
    %16 = arith.addf %12, %15 : vector<1x256xf32>
    %c0_14 = arith.constant 0 : index
    %c0_15 = arith.constant 0 : index
    %17 = vector.load %arg6[%c0_14, %c0_15] : memref<8x256xf32, #tpu.memory_space<vmem>>, vector<1x256xf32>
    tpu.vector_store %arg6[%c0_14, %c0_15], %16 {strides = array<i32>} : memref<8x256xf32, #tpu.memory_space<vmem>>, vector<1x256xf32>,
    return
  }
  func.func @transform_0(%arg0: i32, %arg1: i32) -> (i32, i32) {
    %c2_i32 = arith.constant 2 : i32
    %0 = arith.muli %arg0, %c2_i32 : i32
    %1 = arith.addi %0, %arg1 : i32
    %c0_i32 = arith.constant 0 : i32
    %c0_i32_0 = arith.constant 0 : i32
    return %1, %c0_i32 : i32, i32
  }
  func.func @transform_1(%arg0: i32, %arg1: i32) -> (i32, i32) {
    %c0_i32 = arith.constant 0 : i32
    %c0_i32_0 = arith.constant 0 : i32
    %c0_i32_1 = arith.constant 0 : i32
    return %c0_i32, %c0_i32_0 : i32, i32
  }
  func.func @transform_2(%arg0: i32, %arg1: i32) -> (i32, i32) {
    %c2_i32 = arith.constant 2 : i32
    %0 = arith.muli %arg0, %c2_i32 : i32
    %1 = arith.addi %0, %arg1 : i32
    %c0_i32 = arith.constant 0 : i32
    %c0_i32_0 = arith.constant 0 : i32
    return %1, %c0_i32 : i32, i32
  }
  func.func @transform_3(%arg0: i32, %arg1: i32) -> (i32, i32) {
    %c0_i32 = arith.constant 0 : i32
    %c0_i32_0 = arith.constant 0 : i32
    return %arg0, %c0_i32 : i32, i32
  }
  func.func @transform_4(%arg0: i32, %arg1: i32) -> (i32, i32) {
    %c0_i32 = arith.constant 0 : i32
    %c0_i32_0 = arith.constant 0 : i32
    return %arg0, %c0_i32 : i32, i32
  }
}

</mosaic_0001>

<llo_original>
// kernel: tpu_custom_call.1
$region0: #{tpu_custom_call.1}
  #allocation0 [shape = 'u32[]', space=smem, size = 0x4, offset = 0x4, fixed_abs, tag = 'smem constant byte address 0x4 - core index']
  #allocation1 [shape = 'u32[72,128]{1,0:T(1,128)}', space=vmem, size = 0x9000, scoped, tag = 'internal scratch']
  %s0 = inlined_call_operand.hbm [shape: bf16[64,100], index: 0, kind: input, shape index: {}]
  %s1 = inlined_call_operand.hbm [shape: bf16[100,256], index: 1, kind: input, shape index: {}]
  %s2 = inlined_call_operand.hbm [shape: f32[64,256], index: 2, kind: output, shape index: {0}]
  %s3 = inlined_call_operand.hbm [shape: f32[16,256], index: 3, kind: output, shape index: {1}]
  %s4 = inlined_call_operand.hbm [shape: f32[16,256], index: 4, kind: output, shape index: {2}]
  %5 = xla_tuple %s2, %s3, %s4
  %s6 = sld [smem:[#allocation0]]
  $region69: #{tpu_custom_call.1} parent=0
    _
  %s8 = ssub.s32 1, %s6
  %s9 = scalar_select 0, %s8, %s6
  $region1: #{tpu_custom_call.1} parent=0
    #allocation2 [shape = 'u8[8192]{0}', space=vmem, size = 0x2000, scoped, tag = 'input window, operand 0']
    #allocation3 [shape = 's32[2]{0}', space=sflag, size = 0x8, scoped, tag = 'scoped memory for tpu_custom_call.1']
    #allocation4 [shape = 's32[2]{0}', space=sflag, size = 0x8, scoped, tag = 'scoped memory for tpu_custom_call.1']
    #allocation5 [shape = 'u8[53248]{0}', space=vmem, size = 0xd000, scoped, tag = 'input window, operand 1, single buffered']
    #allocation6 [shape = 's32[1]{0}', space=sflag, size = 0x4, scoped, tag = 'scoped memory for tpu_custom_call.1']
    #allocation7 [shape = 'u8[32768]{0}', space=vmem, size = 0x8000, scoped, tag = 'output window, operand 0']
    #allocation8 [shape = 'u8[16384]{0}', space=vmem, size = 0x4000, scoped, tag = 'output window, operand 1']
    #allocation9 [shape = 's32[2]{0}', space=sflag, size = 0x8, scoped, tag = 'scoped memory for tpu_custom_call.1']
    #allocation10 [shape = 'u8[16384]{0}', space=vmem, size = 0x4000, scoped, tag = 'output window, operand 2']
    %10 = vsyncpa [#allocation3], 0
    %s11 = scalar_lea.sflag [#allocation3], 1
    %12 = vsyncpa %s11, 0
    %13 = vsyncpa [#allocation6], 0
    %14 = vsyncpa [#allocation4], 0
    %s15 = scalar_lea.sflag [#allocation4], 1
    %16 = vsyncpa %s15, 0
    %17 = vsyncpa [#allocation9], 0
    %s18 = scalar_lea.sflag [#allocation9], 1
    %19 = vsyncpa %s18, 0
    loop: start=0, step=1, limit=6
    $region2: #{tpu_custom_call.1} parent=1 // loop_pre_header
      _
    $region3: #{tpu_custom_call.1} parent=1 // loop_header
      %s21 = sphi 0, %s25
      %p22 = scmp.ge.s32.totalorder %s21, 6
      %s28 = sphi 0, %s40
      %s29 = sphi 0, %s36
      %s30 = sphi 0, %s28
      %s31 = sphi 0, %s29
      %s32 = sphi 0, %s30
      %s33 = sphi 0, %s31
      %s47 = sphi 0, %s49
      %s50 = sphi 0, %s47
      %s51 = sphi 0, %s50
      %s67 = sphi 0, %s51
      %s71 = sphi 0, %s71
      %s73 = sphi 0, %s71
      %s74 = sphi 0, %s73
      %s88 = sphi 0, %s74
      %s98 = sphi 0, %s100
      %s101 = sphi 0, %s98
      %s102 = sphi 0, %s101
      %s118 = sphi 0, %s102
      %s124 = sphi 0, %s126
      %s127 = sphi 0, %s124
      %s128 = sphi 0, %s127
      %s144 = sphi 0, %s128
      %s150 = sphi 0, %s152
      %s153 = sphi 0, %s150
      %s154 = sphi 0, %s153
      %s170 = sphi 0, %s154
    $region4: #{tpu_custom_call.1} parent=1 // loop_header_branch
      %24 = sbr.rel (%p22) target = $region8
    $region5: #{tpu_custom_call.1} parent=1 // loop_body
      %s26 = ssub.s32 %s21, 1
      %s27 = ssub.s32 %s21, 2
      %s34 = sadd.s32 1, %s29
      %p35 = scmp.ge.s32.totalorder %s34, 2
      %s36 = scalar_select %p35, 0, %s34
      %s37 = sadd.s32 1, %s28
      %s38 = scalar_select %p35, %s37, %s28
      %p39 = scmp.ge.s32.totalorder %s38, 2
      %s40 = scalar_select %p39, 0, %s38
      %s41 = smul.u32 %s28, 2
      %s42 = sadd.s32 %s41, %s29
      %s43 = smul.u32 %s40, 2
      %s44 = sadd.s32 %s43, %s36
      %s45 = ssub.s32 %s42, %s44
      %p46 = scmp.eq.s32.totalorder %s45, 0
      %s48 = sadd.s32 %s47, 1
      %s49 = scalar_select %p46, %s47, %s48
      %p52 = pneg %p46
      %p53 = scmp.eq.s32.totalorder %s21, 3
      %p54 = por %p52, %p53
      %p55 = scmp.ne.s32.totalorder %s47, %s50
      %p56 = scmp.eq.s32.totalorder %s21, 0
      %p57 = por %p55, %p56
      %p58 = scmp.ne.s32.totalorder %s47, %s50
      %p59 = scmp.eq.s32.totalorder %s26, 3
      %p60 = por %p58, %p59
      %p61 = scmp.ne.s32.totalorder %s50, %s51
      %p62 = scmp.eq.s32.totalorder %s26, 0
      %p63 = por %p61, %p62
      %p64 = scmp.ne.s32.totalorder %s50, %s51
      %p65 = scmp.eq.s32.totalorder %s27, 3
      %p66 = por %p64, %p65
      %p68 = scmp.ne.s32.totalorder %s51, %s67
      %p69 = scmp.eq.s32.totalorder %s27, 0
      %p70 = por %p68, %p69
      %s72 = sadd.s32 %s71, 1
      %p75 = scmp.eq.s32.totalorder %s21, 3
      %p76 = scmp.ne.s32.totalorder %s71, %s73
      %p77 = scmp.eq.s32.totalorder %s21, 0
      %p78 = por %p76, %p77
      %p79 = scmp.ne.s32.totalorder %s71, %s73
      %p80 = scmp.eq.s32.totalorder %s26, 3
      %p81 = por %p79, %p80
      %p82 = scmp.ne.s32.totalorder %s73, %s74
      %p83 = scmp.eq.s32.totalorder %s26, 0
      %p84 = por %p82, %p83
      %p85 = scmp.ne.s32.totalorder %s73, %s74
      %p86 = scmp.eq.s32.totalorder %s27, 3
      %p87 = por %p85, %p86
      %p89 = scmp.ne.s32.totalorder %s74, %s88
      %p90 = scmp.eq.s32.totalorder %s27, 0
      %p91 = por %p89, %p90
      %s92 = smul.u32 %s28, 2
      %s93 = sadd.s32 %s92, %s29
      %s94 = smul.u32 %s40, 2
      %s95 = sadd.s32 %s94, %s36
      %s96 = ssub.s32 %s93, %s95
      %p97 = scmp.eq.s32.totalorder %s96, 0
      %s99 = sadd.s32 %s98, 1
      %s100 = scalar_select %p97, %s98, %s99
      %p103 = pneg %p97
      %p104 = scmp.eq.s32.totalorder %s21, 3
      %p105 = por %p103, %p104
      %p106 = scmp.ne.s32.totalorder %s98, %s101
      %p107 = scmp.eq.s32.totalorder %s21, 0
      %p108 = por %p106, %p107
      %p109 = scmp.ne.s32.totalorder %s98, %s101
      %p110 = scmp.eq.s32.totalorder %s26, 3
      %p111 = por %p109, %p110
      %p112 = scmp.ne.s32.totalorder %s101, %s102
      %p113 = scmp.eq.s32.totalorder %s26, 0
      %p114 = por %p112, %p113
      %p115 = scmp.ne.s32.totalorder %s101, %s102
      %p116 = scmp.eq.s32.totalorder %s27, 3
      %p117 = por %p115, %p116
      %p119 = scmp.ne.s32.totalorder %s102, %s118
      %p120 = scmp.eq.s32.totalorder %s27, 0
      %p121 = por %p119, %p120
      %s122 = ssub.s32 %s28, %s40
      %p123 = scmp.eq.s32.totalorder %s122, 0
      %s125 = sadd.s32 %s124, 1
      %s126 = scalar_select %p123, %s124, %s125
      %p129 = pneg %p123
      %p130 = scmp.eq.s32.totalorder %s21, 3
      %p131 = por %p129, %p130
      %p132 = scmp.ne.s32.totalorder %s124, %s127
      %p133 = scmp.eq.s32.totalorder %s21, 0
      %p134 = por %p132, %p133
      %p135 = scmp.ne.s32.totalorder %s124, %s127
      %p136 = scmp.eq.s32.totalorder %s26, 3
      %p137 = por %p135, %p136
      %p138 = scmp.ne.s32.totalorder %s127, %s128
      %p139 = scmp.eq.s32.totalorder %s26, 0
      %p140 = por %p138, %p139
      %p141 = scmp.ne.s32.totalorder %s127, %s128
      %p142 = scmp.eq.s32.totalorder %s27, 3
      %p143 = por %p141, %p142
      %p145 = scmp.ne.s32.totalorder %s128, %s144
      %p146 = scmp.eq.s32.totalorder %s27, 0
      %p147 = por %p145, %p146
      %s148 = ssub.s32 %s28, %s40
      %p149 = scmp.eq.s32.totalorder %s148, 0
      %s151 = sadd.s32 %s150, 1
      %s152 = scalar_select %p149, %s150, %s151
      %p155 = pneg %p149
      %p156 = scmp.eq.s32.totalorder %s21, 3
      %p157 = por %p155, %p156
      %p158 = scmp.ne.s32.totalorder %s150, %s153
      %p159 = scmp.eq.s32.totalorder %s21, 0
      %p160 = por %p158, %p159
      %p161 = scmp.ne.s32.totalorder %s150, %s153
      %p162 = scmp.eq.s32.totalorder %s26, 3
      %p163 = por %p161, %p162
      %p164 = scmp.ne.s32.totalorder %s153, %s154
      %p165 = scmp.eq.s32.totalorder %s26, 0
      %p166 = por %p164, %p165
      %p167 = scmp.ne.s32.totalorder %s153, %s154
      %p168 = scmp.eq.s32.totalorder %s27, 3
      %p169 = por %p167, %p168
      %p171 = scmp.ne.s32.totalorder %s154, %s170
      %p172 = scmp.eq.s32.totalorder %s27, 0
      %p173 = por %p171, %p172
      %p174 = scmp.le.s32.totalorder 1, %s21
      %p175 = scmp.lt.s32.totalorder %s21, 5
      %p176 = pnand %p174, %p175
      %p177 = pneg %p176
      // Predicated region
      $region9: #{tpu_custom_call.1} parent=5 // pred_check
        _
      $region10: #{tpu_custom_call.1} parent=5 // pred_check_branch
        %179 = sbr.rel (%p176) target = $region12
      $region11: #{tpu_custom_call.1} parent=5 // pred_region
        %s180 = ssub.s32 %s21, 1
        // Predicated region
        $region13: #{tpu_custom_call.1} parent=11 // pred_check
          %p181 = pneg %p84
        $region14: #{tpu_custom_call.1} parent=11 // pred_check_branch
          %183 = sbr.rel (%p181) target = $region16
        $region15: #{tpu_custom_call.1} parent=11 // pred_region
          %185 = vsyncadd [#allocation6], 0
          %s186 = sshll.u32 %s1, 4
          %s187 = int_to_ptr.hbm [resolvable:$true] %s186
          %s188 = sshll.u32 [#allocation5], 4
          %s189 = int_to_ptr.vmem [resolvable:$true] %s188
          %194 = dma.hbm_to_vmem [thread:$0]  %s187, 1664, %s189, [#allocation6], 128, 128, 8
        $region16: #{tpu_custom_call.1} parent=11 // pred_fallthru
          _
      $region12: #{tpu_custom_call.1} parent=5 // pred_fallthru
        _
      %p195 = scmp.lt.s32.totalorder %s21, 4
      // Predicated region
      $region17: #{tpu_custom_call.1} parent=5 // pred_check
        %p196 = pneg %p195
      $region18: #{tpu_custom_call.1} parent=5 // pred_check_branch
        %198 = sbr.rel (%p196) target = $region20
      $region19: #{tpu_custom_call.1} parent=5 // pred_region
        // Predicated region
        $region21: #{tpu_custom_call.1} parent=19 // pred_check
          %p199 = pneg %p57
        $region22: #{tpu_custom_call.1} parent=19 // pred_check_branch
          %201 = sbr.rel (%p199) target = $region24
        $region23: #{tpu_custom_call.1} parent=19 // pred_region
          %s202 = sand.u32 %s47, 1
          %s203 = scalar_lea.sflag [#allocation3], %s202
          %s204 = sand.u32 %s47, 1
          %s205 = smul.addr %s204, 8
          %s206 = scalar_lea.vmem [#allocation2], %s205
          %s207 = smul.u32 %s28, 2
          %s208 = sadd.s32 %s207, %s29
          %s209 = smul.u32 2, %s208
          %211 = vsyncadd %s203, 0
          %s212 = smul.addr %s209, 4
          %s213 = scalar_lea.hbm %s0, %s212
          %s214 = sshll.u32 %s213, 4
          %s215 = int_to_ptr.hbm [resolvable:$true] %s214
          %s216 = sshll.u32 %s206, 4
          %s217 = int_to_ptr.vmem [resolvable:$true] %s216
          %222 = dma.hbm_to_vmem [thread:$0]  %s215, 128, %s217, %s203, 64, 64, 4
        $region24: #{tpu_custom_call.1} parent=19 // pred_fallthru
          _
      $region20: #{tpu_custom_call.1} parent=5 // pred_fallthru
        _
      %p223 = scmp.le.s32.totalorder 1, %s21
      %p224 = scmp.lt.s32.totalorder %s21, 5
      %p225 = pnand %p223, %p224
      %p226 = pneg %p225
      // Predicated region
      $region25: #{tpu_custom_call.1} parent=5 // pred_check
        _
      $region26: #{tpu_custom_call.1} parent=5 // pred_check_branch
        %228 = sbr.rel (%p225) target = $region28
      $region27: #{tpu_custom_call.1} parent=5 // pred_region
        %s229 = ssub.s32 %s21, 1
        %s230 = sand.u32 %s50, 1
        %s231 = scalar_lea.sflag [#allocation3], %s230
        %s232 = sand.u32 %s50, 1
        %s233 = smul.addr %s232, 8
        %s234 = scalar_lea.vmem [#allocation2], %s233
        // Predicated region
        $region29: #{tpu_custom_call.1} parent=27 // pred_check
          %p235 = pneg %p63
        $region30: #{tpu_custom_call.1} parent=27 // pred_check_branch
          %237 = sbr.rel (%p235) target = $region32
        $region31: #{tpu_custom_call.1} parent=27 // pred_region
          %239 = dma.done %s231, 128
        $region32: #{tpu_custom_call.1} parent=27 // pred_fallthru
          _
        // Predicated region
        $region33: #{tpu_custom_call.1} parent=27 // pred_check
          %p240 = pneg %p84
        $region34: #{tpu_custom_call.1} parent=27 // pred_check_branch
          %242 = sbr.rel (%p240) target = $region36
        $region35: #{tpu_custom_call.1} parent=27 // pred_region
          %244 = dma.done [#allocation6], 1664
        $region36: #{tpu_custom_call.1} parent=27 // pred_fallthru
          _
        %s245 = sand.u32 %s50, 1
        %s246 = scalar_lea.sflag [#allocation3], %s245
        %s247 = sand.u32 %s50, 1
        %s248 = smul.addr %s247, 8
        %s249 = scalar_lea.vmem [#allocation2], %s248
        %p250 = pneg %p63
        %p251 = pneg %p60
        %p252 = pneg %p84
        %p253 = pneg %p81
        %p254 = pneg %p114
        %p255 = pneg %p111
        %s256 = sand.u32 %s101, 1
        %s257 = scalar_lea.sflag [#allocation4], %s256
        %s258 = sand.u32 %s101, 1
        %s259 = smul.addr %s258, 32
        %s260 = scalar_lea.vmem [#allocation7], %s259
        %p261 = pneg %p140
        %p262 = pneg %p137
        %s263 = sand.u32 %s26, 1
        %s264 = scalar_lea.sflag [#allocation9], %s263
        %s265 = sand.u32 %s127, 1
        %s266 = smul.addr %s265, 16
        %s267 = scalar_lea.vmem [#allocation8], %s266
        %p268 = pneg %p166
        %p269 = pneg %p163
        %s270 = sand.u32 %s26, 1
        %s271 = scalar_lea.sflag [#allocation9], %s270
        %s272 = sand.u32 %s153, 1
        %s273 = smul.addr %s272, 16
        %s274 = scalar_lea.vmem [#allocation10], %s273
        %s275 = smul.u32 %s30, 2
        %s276 = sadd.s32 %s275, %s31
        %s277 = smul.u32 2, %s276
        %s278 = smul.u32 %s30, 2
        %s279 = sadd.s32 %s278, %s31
        %s280 = smul.u32 2, %s279
        %p282 = scmp.eq.s32.totalorder %s31, 0
        // Predicated region
        $region37: #{tpu_custom_call.1} parent=27 // pred_check
          %p283 = pneg %p282
        $region38: #{tpu_custom_call.1} parent=27 // pred_check_branch
          %285 = sbr.rel (%p283) target = $region40
        $region39: #{tpu_custom_call.1} parent=27 // pred_region
          %286 = vst [vmem:[%s267] sm:$0xff] 0.0
          %287 = vst [vmem:[%s267 + $0x8] sm:$0xff] 0.0
          %288 = vst [vmem:[%s274] sm:$0xff] 0.0
          %289 = vst [vmem:[%s274 + $0x8] sm:$0xff] 0.0
        $region40: #{tpu_custom_call.1} parent=27 // pred_fallthru
          _
        %v290 = vld [vmem:[%s234] sm:$0xf]
        %v291 = vld [vmem:[%s234 + $0x4] sm:$0xf]
        %v292 = vld [vmem:[#allocation5] sm:$0xff]
        %v293 = vld [vmem:[#allocation5 + $0x8] sm:$0xff]
        %v294 = vld [vmem:[#allocation5 + $0x10] sm:$0xff]
        %v295 = vld [vmem:[#allocation5 + $0x18] sm:$0xff]
        %v296 = vld [vmem:[#allocation5 + $0x20] sm:$0xff]
        %v297 = vld [vmem:[#allocation5 + $0x28] sm:$0xff]
        %v298 = vld [vmem:[#allocation5 + $0x30] sm:$0xff]
        %v299 = vld [vmem:[#allocation5 + $0x38] sm:$0xff]
        %v300 = vld [vmem:[#allocation5 + $0x40] sm:$0xff]
        %v301 = vld [vmem:[#allocation5 + $0x48] sm:$0xff]
        %v302 = vld [vmem:[#allocation5 + $0x50] sm:$0xff]
        %v303 = vld [vmem:[#allocation5 + $0x58] sm:$0xff]
        %v304 = vld [vmem:[#allocation5 + $0x60] sm:$0x33]
        %v307 = vunpack.c.l.b16 %v290
        %v308 = vunpack.c.l.b16 %v291
        %v309 = vpack.c.b16 %v308, %v307
        %v323 = vunpack.c.l.b16 %v292
        %v324 = vunpack.c.h.b16 %v292
        %v325 = vunpack.c.l.b16 %v293
        %v326 = vunpack.c.h.b16 %v293
        %v327 = vunpack.c.l.b16 %v294
        %v328 = vunpack.c.h.b16 %v294
        %v329 = vunpack.c.l.b16 %v295
        %v330 = vunpack.c.h.b16 %v295
        %v331 = vunpack.c.l.b16 %v296
        %v332 = vunpack.c.h.b16 %v296
        %v333 = vunpack.c.l.b16 %v297
        %v334 = vunpack.c.h.b16 %v297
        %v335 = vunpack.c.l.b16 %v298
        %v336 = vunpack.c.h.b16 %v298
        %v337 = vunpack.c.l.b16 %v299
        %v338 = vunpack.c.h.b16 %v299
        %v339 = vunpack.c.l.b16 %v300
        %v340 = vunpack.c.h.b16 %v300
        %v341 = vunpack.c.l.b16 %v301
        %v342 = vunpack.c.h.b16 %v301
        %v343 = vunpack.c.l.b16 %v302
        %v344 = vunpack.c.h.b16 %v302
        %v345 = vunpack.c.l.b16 %v303
        %v346 = vunpack.c.h.b16 %v303
        %v347 = vunpack.c.l.b16 %v304
        %v348 = vunpack.c.h.b16 %v304
        %v349 = vpack.c.b16 %v325, %v323
        %v350 = vpack.c.b16 %v326, %v324
        %v351 = vpack.c.b16 %v329, %v327
        %v352 = vpack.c.b16 %v330, %v328
        %v353 = vpack.c.b16 %v333, %v331
        %v354 = vpack.c.b16 %v334, %v332
        %v355 = vpack.c.b16 %v337, %v335
        %v356 = vpack.c.b16 %v338, %v336
        %v357 = vpack.c.b16 %v341, %v339
        %v358 = vpack.c.b16 %v342, %v340
        %v359 = vpack.c.b16 %v345, %v343
        %v360 = vpack.c.b16 %v346, %v344
        %v361 = vpack.c.b16 %v347, %v347
        %v362 = vpack.c.b16 %v348, %v348
        %vm375 = vcmask 818176
        %v377 = vsel %vm375, %v309, 0
        %vm379 = vcmask 1041408
        %v381 = vsel %vm379, %v361, 0
        %v384 = vsel %vm379, %v362, 0
        %386 = vmatpush.bf16.msra.mxu0 0
        %387 = vmatpush.bf16.msra.mxu0 %v381
        %388 = vmatpush.bf16.msra.mxu0 %v359
        %389 = vmatpush.bf16.msra.mxu0 %v357
        %390 = vmatpush.bf16.msra.mxu0 %v355
        %391 = vmatpush.bf16.msra.mxu0 %v353
        %392 = vmatpush.bf16.msra.mxu0 %v351
        %393 = vmatpush.bf16.msra.mxu0 %v349
        %394 = vmatmul.bf16.gmra.mxu0 %v377
        %v395 = vpop.f32.mrf.mxu0
        %v396 = vadd.f32 0.0, %v395
        %v397 = vpop.f32.mrf.mxu0
        %v398 = vadd.f32 0.0, %v397
        %399 = vdwg.mxu0
        %400 = vmatpush.bf16.msra.mxu0 0
        %401 = vmatpush.bf16.msra.mxu0 %v384
        %402 = vmatpush.bf16.msra.mxu0 %v360
        %403 = vmatpush.bf16.msra.mxu0 %v358
        %404 = vmatpush.bf16.msra.mxu0 %v356
        %405 = vmatpush.bf16.msra.mxu0 %v354
        %406 = vmatpush.bf16.msra.mxu0 %v352
        %407 = vmatpush.bf16.msra.mxu0 %v350
        %408 = vmatmul.bf16.gmra.mxu0 %v377
        %v409 = vpop.f32.mrf.mxu0
        %v410 = vadd.f32 0.0, %v409
        %v411 = vpop.f32.mrf.mxu0
        %v412 = vadd.f32 0.0, %v411
        %413 = vdwg.mxu0
        %414 = vst [vmem:[%s260] sm:$0xff] %v396
        %415 = vst [vmem:[%s260 + $0x8] sm:$0xff] %v410
        %416 = vst [vmem:[%s260 + $0x10] sm:$0xff] %v398
        %417 = vst [vmem:[%s260 + $0x18] sm:$0xff] %v412
        %v418 = vld [vmem:[%s267] ss:$8 sm:$0x3]
        %v419 = vadd.f32 %v396, %v398
        %v420 = vrot.slane %v419, 4
        %v421 = vadd.f32 %v419, %v420
        %v422 = vrot.slane %v421, 2
        %v423 = vadd.f32 %v421, %v422
        %v424 = vrot.slane %v423, 1
        %v425 = vadd.f32 %v423, %v424
        %v426 = vadd.f32 %v410, %v412
        %v427 = vrot.slane %v426, 4
        %v428 = vadd.f32 %v426, %v427
        %v429 = vrot.slane %v428, 2
        %v430 = vadd.f32 %v428, %v429
        %v431 = vrot.slane %v430, 1
        %v432 = vadd.f32 %v430, %v431
        %v435 = vrot.slane %v432, 7
        %vm436 = vcmask 1040384
        %v437 = vsel %vm436, %v425, %v435
        %v439 = vadd.f32 %v418, %v437
        %v440 = vlaneseq
        %vm441 = vcmp.ge.s32.totalorder %v440, 0
        %vm442 = vcmp.lt.s32.totalorder %v440, 256
        %vm443 = vmand %vm441, %vm442
        %444 = vst.msk [vmem:[%s267] ss:$8 sm:$0x3] %vm443, %v439
        %445 = vst.msk [vmem:[%s267] ss:$8 sm:$0x0] %vm443, %v439
        %v446 = vld [vmem:[%s274] ss:$8 sm:$0x3]
        %v447 = vmul.f32 %v396, %v396
        %v448 = vmul.f32 %v410, %v410
        %v449 = vmul.f32 %v398, %v398
        %v450 = vmul.f32 %v412, %v412
        %v451 = vadd.f32 %v447, %v449
        %v452 = vrot.slane %v451, 4
        %v453 = vadd.f32 %v451, %v452
        %v454 = vrot.slane %v453, 2
        %v455 = vadd.f32 %v453, %v454
        %v456 = vrot.slane %v455, 1
        %v457 = vadd.f32 %v455, %v456
        %v458 = vadd.f32 %v448, %v450
        %v459 = vrot.slane %v458, 4
        %v460 = vadd.f32 %v458, %v459
        %v461 = vrot.slane %v460, 2
        %v462 = vadd.f32 %v460, %v461
        %v463 = vrot.slane %v462, 1
        %v464 = vadd.f32 %v462, %v463
        %v467 = vrot.slane %v464, 7
        %v468 = vsel %vm436, %v457, %v467
        %v470 = vadd.f32 %v446, %v468
        %471 = vst.msk [vmem:[%s274] ss:$8 sm:$0x3] %vm443, %v470
        %472 = vst.msk [vmem:[%s274] ss:$8 sm:$0x0] %vm443, %v470
        %s473 = sand.u32 %s101, 1
        %s474 = scalar_lea.sflag [#allocation4], %s473
        %s475 = sand.u32 %s101, 1
        %s476 = smul.addr %s475, 32
        %s477 = scalar_lea.vmem [#allocation7], %s476
        %s478 = sand.u32 %s26, 1
        %s479 = scalar_lea.sflag [#allocation9], %s478
        %s480 = sand.u32 %s127, 1
        %s481 = smul.addr %s480, 16
        %s482 = scalar_lea.vmem [#allocation8], %s481
        %s483 = sand.u32 %s26, 1
        %s484 = scalar_lea.sflag [#allocation9], %s483
        %s485 = sand.u32 %s153, 1
        %s486 = smul.addr %s485, 16
        %s487 = scalar_lea.vmem [#allocation10], %s486
        // Predicated region
        $region41: #{tpu_custom_call.1} parent=27 // pred_check
          %p488 = pneg %p111
        $region42: #{tpu_custom_call.1} parent=27 // pred_check_branch
          %490 = sbr.rel (%p488) target = $region44
        $region43: #{tpu_custom_call.1} parent=27 // pred_region
          %s491 = smul.u32 %s30, 2
          %s492 = sadd.s32 %s491, %s31
          %s493 = smul.u32 2, %s492
          %495 = vsyncadd %s474, 0
          %s496 = smul.addr %s493, 2
          %s497 = smul.addr %s496, 8
          %s498 = scalar_lea.hbm %s2, %s497
          %s499 = sshll.u32 %s477, 4
          %s500 = int_to_ptr.vmem [resolvable:$true] %s499
          %s501 = sshll.u32 %s498, 4
          %s502 = int_to_ptr.hbm [resolvable:$true] %s501
          %507 = dma.vmem_to_hbm [thread:$0]  %s500, 512, %s502, %s474, 256, 256, 16
        $region44: #{tpu_custom_call.1} parent=27 // pred_fallthru
          _
        // Predicated region
        $region45: #{tpu_custom_call.1} parent=27 // pred_check
          %p508 = pneg %p137
        $region46: #{tpu_custom_call.1} parent=27 // pred_check_branch
          %510 = sbr.rel (%p508) target = $region48
        $region47: #{tpu_custom_call.1} parent=27 // pred_region
          %512 = vsyncadd %s479, 0
          %s513 = smul.addr %s30, 2
          %s514 = smul.addr %s513, 8
          %s515 = scalar_lea.hbm %s3, %s514
          %s517 = sshll.u32 %s482, 4
          %s518 = int_to_ptr.vmem [resolvable:$true] %s517
          %s519 = sshll.u32 %s515, 4
          %s520 = int_to_ptr.hbm [resolvable:$true] %s519
          %522 = dma.vmem_to_hbm [thread:$0]  %s518, 256, %s520, %s479
        $region48: #{tpu_custom_call.1} parent=27 // pred_fallthru
          _
        // Predicated region
        $region49: #{tpu_custom_call.1} parent=27 // pred_check
          %p523 = pneg %p163
        $region50: #{tpu_custom_call.1} parent=27 // pred_check_branch
          %525 = sbr.rel (%p523) target = $region52
        $region51: #{tpu_custom_call.1} parent=27 // pred_region
          %527 = vsyncadd %s484, 0
          %s528 = smul.addr %s30, 2
          %s529 = smul.addr %s528, 8
          %s530 = scalar_lea.hbm %s4, %s529
          %s532 = sshll.u32 %s487, 4
          %s533 = int_to_ptr.vmem [resolvable:$true] %s532
          %s534 = sshll.u32 %s530, 4
          %s535 = int_to_ptr.hbm [resolvable:$true] %s534
          %537 = dma.vmem_to_hbm [thread:$0]  %s533, 256, %s535, %s484
        $region52: #{tpu_custom_call.1} parent=27 // pred_fallthru
          _
      $region28: #{tpu_custom_call.1} parent=5 // pred_fallthru
        _
      %p538 = scmp.le.s32.totalorder 2, %s21
      // Predicated region
      $region53: #{tpu_custom_call.1} parent=5 // pred_check
        %p539 = pneg %p538
      $region54: #{tpu_custom_call.1} parent=5 // pred_check_branch
        %541 = sbr.rel (%p539) target = $region56
      $region55: #{tpu_custom_call.1} parent=5 // pred_region
        %s542 = ssub.s32 %s21, 2
        // Predicated region
        $region57: #{tpu_custom_call.1} parent=55 // pred_check
          %p543 = pneg %p117
        $region58: #{tpu_custom_call.1} parent=55 // pred_check_branch
          %545 = sbr.rel (%p543) target = $region60
        $region59: #{tpu_custom_call.1} parent=55 // pred_region
          %s546 = sand.u32 %s102, 1
          %s547 = scalar_lea.sflag [#allocation4], %s546
          %s548 = sand.u32 %s102, 1
          %s549 = smul.addr %s548, 32
          %s550 = scalar_lea.vmem [#allocation7], %s549
          %552 = dma.done %s547, 512
        $region60: #{tpu_custom_call.1} parent=55 // pred_fallthru
          _
        // Predicated region
        $region61: #{tpu_custom_call.1} parent=55 // pred_check
          %p553 = pneg %p143
        $region62: #{tpu_custom_call.1} parent=55 // pred_check_branch
          %555 = sbr.rel (%p553) target = $region64
        $region63: #{tpu_custom_call.1} parent=55 // pred_region
          %s556 = sand.u32 %s27, 1
          %s557 = scalar_lea.sflag [#allocation9], %s556
          %s558 = sand.u32 %s128, 1
          %s559 = smul.addr %s558, 16
          %s560 = scalar_lea.vmem [#allocation8], %s559
          %562 = dma.done %s557, 256
        $region64: #{tpu_custom_call.1} parent=55 // pred_fallthru
          _
        // Predicated region
        $region65: #{tpu_custom_call.1} parent=55 // pred_check
          %p563 = pneg %p169
        $region66: #{tpu_custom_call.1} parent=55 // pred_check_branch
          %565 = sbr.rel (%p563) target = $region68
        $region67: #{tpu_custom_call.1} parent=55 // pred_region
          %s566 = sand.u32 %s27, 1
          %s567 = scalar_lea.sflag [#allocation9], %s566
          %s568 = sand.u32 %s154, 1
          %s569 = smul.addr %s568, 16
          %s570 = scalar_lea.vmem [#allocation10], %s569
          %572 = dma.done %s567, 256
        $region68: #{tpu_custom_call.1} parent=55 // pred_fallthru
          _
      $region56: #{tpu_custom_call.1} parent=5 // pred_fallthru
        _
    $region6: #{tpu_custom_call.1} parent=1 // loop_footer
      %s25 = sadd.s32 1, %s21
    $region7: #{tpu_custom_call.1} parent=1 // loop_footer_branch
      %20 = sbr.rel target = $region3
    $region8: #{tpu_custom_call.1} parent=1 // loop_exit
      _
    %573 = vsyncpa [#allocation3], 1
    %s574 = scalar_lea.sflag [#allocation3], 1
    %575 = vsyncpa %s574, 1
    %576 = vsyncpa [#allocation6], 1
    %577 = vsyncpa [#allocation4], 1
    %s578 = scalar_lea.sflag [#allocation4], 1
    %579 = vsyncpa %s578, 1
    %580 = vsyncpa [#allocation9], 1
    %s581 = scalar_lea.sflag [#allocation9], 1
    %582 = vsyncpa %s581, 1

</llo_original>
